<compile_context>
chip_gen: v7x
topology: tpu7x:2x2x1
jax: 0.10.0
libtpu: 0.0.40
codegen_flags: <defaults>
</compile_context>

<pallas_src>
import jax
import jax.numpy as jnp
from jax.experimental import pallas as pl
from jax.experimental.pallas import tpu as pltpu


_VMEM_LIMIT = 32 * 1024 * 1024  # explicit budget, comfortably under v7x's 64 MiB


def _pick_tiles(C, T):
    # Last-two block dims must be multiples of (8, 128) or equal the full dims.
    tC = C if C <= 256 else 256
    tT = T if T <= 4096 else 4096
    return tC, tT


def _sum_kernel(x_ref, s_ref):
    # Fast path: no masking needed (lengths is None, no padded edge tiles).
    # x_ref: (1, tC, tT) input block
    # s_ref: (1, 1, tC) f32 output block, resident across the T grid axis
    ti = pl.program_id(2)

    @pl.when(ti == 0)
    def _():
        s_ref[...] = jnp.zeros_like(s_ref)

    s_ref[...] += jnp.sum(x_ref[0].astype(jnp.float32), axis=1)[None, None, :]


def _masked_sum_kernel(thresh_ref, x_ref, s_ref):
    # thresh_ref: (B,) int32 in SMEM (scalar prefetch)
    # x_ref:      (1, tC, tT) input block
    # s_ref:      (1, 1, tC) f32 output block, resident across the T grid axis
    b = pl.program_id(0)
    ti = pl.program_id(2)

    @pl.when(ti == 0)
    def _():
        s_ref[...] = jnp.zeros_like(s_ref)

    tC, tT = x_ref.shape[1], x_ref.shape[2]
    t_idx = jax.lax.broadcasted_iota(jnp.int32, (tC, tT), 1) + ti * tT
    mask = t_idx < thresh_ref[b]            # also zeroes OOB columns of edge tiles
    xm = jnp.where(mask, x_ref[0].astype(jnp.float32), 0.0)
    s_ref[...] += jnp.sum(xm, axis=1)[None, None, :]


def _se_gate_kernel(s_ref, d_ref, w1_ref, b1_ref, w2_ref, b2_ref, g_ref):
    # s_ref: (B, C) f32 sums; d_ref: (B, 1) f32 frame counts
    # w1_ref: (C, S); b1_ref: (1, S); w2_ref: (S, C_out); b2_ref: (1, C_out)
    s_mean = s_ref[...] / d_ref[...]
    z = jnp.dot(s_mean, w1_ref[...], preferred_element_type=jnp.float32)
    z = jnp.maximum(z + b1_ref[...], 0.0)
    y = jnp.dot(z, w2_ref[...], preferred_element_type=jnp.float32) + b2_ref[...]
    g_ref[...] = 1.0 / (1.0 + jnp.exp(-y))


def _se_scale_kernel(x_ref, g_ref, o_ref):
    # x_ref: (1, tC, tT); g_ref: (1, tC, 1) f32; o_ref: (1, tC, tT)
    o_ref[...] = (x_ref[...].astype(jnp.float32) * g_ref[...]).astype(o_ref.dtype)


def se_block_forward(x, w1, b1, w2, b2, lengths=None):
    """SEBlock forward.

    x:  (B, C_in, T)
    w1: (se_channels, C_in, 1), b1: (se_channels,)   [torch Conv1d k=1 weights]
    w2: (C_out, se_channels, 1), b2: (C_out,)
    lengths: optional (B,) relative lengths (SpeechBrain convention, fraction of T).
    Returns sigmoid(conv2(relu(conv1(pool(x))))) * x, shape (B, C_out, T).
    """
    B, C, T = x.shape
    S, c_in_w, k1 = w1.shape
    C_out, s_w, k2 = w2.shape
    assert k1 == 1 and k2 == 1, "SEBlock convolutions have kernel_size=1"
    assert c_in_w == C and s_w == S
    assert C_out == C, "SE gating broadcast requires out_channels == in_channels"

    tC, tT = _pick_tiles(C, T)
    nC = pl.cdiv(C, tC)
    nT = pl.cdiv(T, tT)

    # Per-batch number of valid frames. For integer t: (t < lengths*T) <=>
    # (t < ceil(lengths*T)), so the integer threshold is exact.
    if lengths is None:
        thresh = jnp.full((B,), T, dtype=jnp.int32)
        denom = jnp.full((B, 1), float(T), dtype=jnp.float32)
    else:
        thresh = jnp.clip(
            jnp.ceil(lengths.astype(jnp.float32) * T), 0, T).astype(jnp.int32)
        denom = thresh.astype(jnp.float32).reshape(B, 1)

    # ---- 1) squeeze: (masked) sum over time -> (B, 1, C) f32 ------------------
    if lengths is None and T % tT == 0:
        # No per-batch mask and no padded edge tiles: pure add-reduce.
        sums = pl.pallas_call(
            _sum_kernel,
            out_shape=jax.ShapeDtypeStruct((B, 1, C), jnp.float32),
            grid=(B, nC, nT),
            in_specs=[pl.BlockSpec((1, tC, tT), lambda b, ci, ti: (b, ci, ti))],
            out_specs=pl.BlockSpec((1, 1, tC), lambda b, ci, ti: (b, 0, ci)),
            compiler_params=pltpu.CompilerParams(
                dimension_semantics=("parallel", "parallel", "arbitrary"),
                vmem_limit_bytes=_VMEM_LIMIT),
        )(x)
    else:
        sums = pl.pallas_call(
            _masked_sum_kernel,
            out_shape=jax.ShapeDtypeStruct((B, 1, C), jnp.float32),
            grid_spec=pltpu.PrefetchScalarGridSpec(
                num_scalar_prefetch=1,
                grid=(B, nC, nT),
                in_specs=[pl.BlockSpec((1, tC, tT),
                                       lambda b, ci, ti, thr: (b, ci, ti))],
                out_specs=pl.BlockSpec((1, 1, tC),
                                       lambda b, ci, ti, thr: (b, 0, ci)),
            ),
            compiler_params=pltpu.CompilerParams(
                dimension_semantics=("parallel", "parallel", "arbitrary"),
                vmem_limit_bytes=_VMEM_LIMIT),
        )(thresh, x)

    # ---- 2) excitation: two k=1 convs (matmuls) + relu + sigmoid --------------
    w1t = jnp.transpose(w1[:, :, 0], (1, 0))        # (C, S)
    w2t = jnp.transpose(w2[:, :, 0], (1, 0))        # (S, C_out)
    gate = pl.pallas_call(
        _se_gate_kernel,
        out_shape=jax.ShapeDtypeStruct((B, C_out), jnp.float32),
        compiler_params=pltpu.CompilerParams(vmem_limit_bytes=_VMEM_LIMIT),
    )(sums.reshape(B, C), denom, w1t, b1.reshape(1, S), w2t, b2.reshape(1, C_out))

    # ---- 3) scale: out = gate * x ---------------------------------------------
    gate3 = gate.reshape(B, C_out, 1)
    out = pl.pallas_call(
        _se_scale_kernel,
        out_shape=jax.ShapeDtypeStruct((B, C, T), x.dtype),
        grid=(B, nC, nT),
        in_specs=[
            pl.BlockSpec((1, tC, tT), lambda b, ci, ti: (b, ci, ti)),
            pl.BlockSpec((1, tC, 1), lambda b, ci, ti: (b, ci, 0)),
        ],
        out_specs=pl.BlockSpec((1, tC, tT), lambda b, ci, ti: (b, ci, ti)),
        compiler_params=pltpu.CompilerParams(
            dimension_semantics=("parallel", "parallel", "parallel"),
            vmem_limit_bytes=_VMEM_LIMIT),
    )(x, gate3)
    return out


def _reference_se_block(x, w1, b1, w2, b2, lengths=None):
    """Pure-JAX replica of the PyTorch SEBlock.forward."""
    B, C, T = x.shape
    if lengths is None:
        s = jnp.mean(x, axis=2, keepdims=True)                          # (B, C, 1)
    else:
        thr = lengths.astype(x.dtype) * T
        mask = (jnp.arange(T, dtype=x.dtype)[None, :] < thr[:, None]).astype(x.dtype)
        mask = mask[:, None, :]                                         # (B, 1, T)
        s = (x * mask).sum(axis=2, keepdims=True) / mask.sum(axis=2, keepdims=True)
    z = jnp.einsum("sc,bco->bso", w1[:, :, 0], s) + b1[None, :, None]
    z = jnp.maximum(z, 0.0)
    y = jnp.einsum("cs,bso->bco", w2[:, :, 0], z) + b2[None, :, None]
    g = jax.nn.sigmoid(y)
    return g * x


if __name__ == "__main__":
    # Small deterministic example consistent with
    # SEBlock(in_channels=4, se_channels=8, out_channels=4) on (B=2, C=4, T=16).
    B, C_in, SE, C_out, T = 2, 4, 8, 4, 16

    key = jax.random.PRNGKey(0)
    kx, k1, kb1, k2, kb2 = jax.random.split(key, 5)
    x = jax.random.normal(kx, (B, C_in, T), dtype=jnp.float32)

    fan1 = C_in * 1
    w1 = jax.random.uniform(k1, (SE, C_in, 1), jnp.float32,
                            minval=-(3.0 / fan1) ** 0.5, maxval=(3.0 / fan1) ** 0.5)
    b1 = jax.random.uniform(kb1, (SE,), jnp.float32,
                            minval=-(1.0 / fan1) ** 0.5, maxval=(1.0 / fan1) ** 0.5)
    fan2 = SE * 1
    w2 = jax.random.uniform(k2, (C_out, SE, 1), jnp.float32,
                            minval=-(3.0 / fan2) ** 0.5, maxval=(3.0 / fan2) ** 0.5)
    b2 = jax.random.uniform(kb2, (C_out,), jnp.float32,
                            minval=-(1.0 / fan2) ** 0.5, maxval=(1.0 / fan2) ** 0.5)

    # lengths=None path (plain mean over time, unmasked fast-path squeeze kernel).
    out = jax.block_until_ready(se_block_forward(x, w1, b1, w2, b2))
    ref = _reference_se_block(x, w1, b1, w2, b2)
    assert out.shape == (B, C_out, T)
    assert jnp.allclose(out, ref, atol=1e-5, rtol=1e-5)

    # lengths path (masked mean over time, scalar-prefetch squeeze kernel).
    lengths = jnp.array([1.0, 0.55], dtype=jnp.float32)
    out_m = jax.block_until_ready(se_block_forward(x, w1, b1, w2, b2, lengths=lengths))
    ref_m = _reference_se_block(x, w1, b1, w2, b2, lengths=lengths)
    assert jnp.allclose(out_m, ref_m, atol=1e-5, rtol=1e-5)

    print("KERNEL_OK")
</pallas_src>

<mosaic_0001>
module attributes {stable_mosaic.version = 11 : i64} {
  func.func @_sum_kernel(%arg0: i32, %arg1: i32, %arg2: i32, %arg3: memref<1x4x16xf32, #tpu.memory_space<vmem>>, %arg4: memref<1x1x4xf32, #tpu.memory_space<vmem>>) attributes {dimension_semantics = [#tpu.dimension_semantics<parallel>, #tpu.dimension_semantics<parallel>, #tpu.dimension_semantics<arbitrary>], iteration_bounds = array<i64: 2, 1, 1>, scalar_prefetch = 0 : i64, scratch_operands = 0 : i64, tpu.core_type = #tpu.core_type<tc>, window_params = [{transform_indices = @transform_0, window_bounds = array<i64: 1, 4, 16>}, {transform_indices = @transform_1, window_bounds = array<i64: 1, 1, 4>}]} {
    %c0_i32 = arith.constant 0 : i32
    %0 = arith.cmpi eq, %arg2, %c0_i32 : i32
    %1 = arith.extui %0 : i1 to i32
    %c0_i32_0 = arith.constant 0 : i32
    %2 = arith.cmpi ne, %1, %c0_i32_0 : i32
    scf.if %2 {
      %cst_9 = arith.constant 0.000000e+00 : f32
      %10 = vector.broadcast %cst_9 : f32 to vector<1x1x4xf32>
      %c0_10 = arith.constant 0 : index
      %c0_11 = arith.constant 0 : index
      %c0_12 = arith.constant 0 : index
      %11 = vector.load %arg4[%c0_10, %c0_11, %c0_12] : memref<1x1x4xf32, #tpu.memory_space<vmem>>, vector<1x1x4xf32>
      tpu.vector_store %arg4[%c0_10, %c0_11, %c0_12], %10 {strides = array<i32>} : memref<1x1x4xf32, #tpu.memory_space<vmem>>, vector<1x1x4xf32>,
    } else {
    }
    %c0 = arith.constant 0 : index
    %c0_1 = arith.constant 0 : index
    %c0_2 = arith.constant 0 : index
    %3 = vector.load %arg4[%c0, %c0_1, %c0_2] : memref<1x1x4xf32, #tpu.memory_space<vmem>>, vector<1x1x4xf32>
    %c0_3 = arith.constant 0 : index
    %c0_4 = arith.constant 0 : index
    %c0_5 = arith.constant 0 : index
    %4 = vector.load %arg3[%c0_3, %c0_4, %c0_5] : memref<1x4x16xf32, #tpu.memory_space<vmem>>, vector<1x4x16xf32>
    %5 = vector.shape_cast %4 : vector<1x4x16xf32> to vector<4x16xf32>
    %cst = arith.constant dense<0.000000e+00> : vector<4xf32>
    %6 = vector.multi_reduction <add>, %5, %cst [1] : vector<4x16xf32> to vector<4xf32>
    %7 = vector.shape_cast %6 : vector<4xf32> to vector<1x1x4xf32>
    %8 = arith.addf %3, %7 : vector<1x1x4xf32>
    %c0_6 = arith.constant 0 : index
    %c0_7 = arith.constant 0 : index
    %c0_8 = arith.constant 0 : index
    %9 = vector.load %arg4[%c0_6, %c0_7, %c0_8] : memref<1x1x4xf32, #tpu.memory_space<vmem>>, vector<1x1x4xf32>
    tpu.vector_store %arg4[%c0_6, %c0_7, %c0_8], %8 {strides = array<i32>} : memref<1x1x4xf32, #tpu.memory_space<vmem>>, vector<1x1x4xf32>,
    return
  }
  func.func @transform_0(%arg0: i32, %arg1: i32, %arg2: i32) -> (i32, i32, i32) {
    %c0_i32 = arith.constant 0 : i32
    return %arg0, %arg1, %arg2 : i32, i32, i32
  }
  func.func @transform_1(%arg0: i32, %arg1: i32, %arg2: i32) -> (i32, i32, i32) {
    %c0_i32 = arith.constant 0 : i32
    %c0_i32_0 = arith.constant 0 : i32
    return %arg0, %c0_i32, %arg1 : i32, i32, i32
  }
}

</mosaic_0001>

<llo_original>
// kernel: tpu_custom_call.1
$region0: #{tpu_custom_call.1}
  #allocation0 [shape = 'u32[]', space=smem, size = 0x4, offset = 0x4, fixed_abs, tag = 'smem constant byte address 0x4 - core index']
  #allocation1 [shape = 'u32[144,128]{1,0:T(1,128)}', space=vmem, size = 0x12000, scoped, tag = 'internal scratch']
  %s0 = inlined_call_operand.hbm [shape: f32[2,4,16], index: 0, kind: input, shape index: {}]
  %s1 = inlined_call_operand.hbm [shape: f32[2,1,4], index: 1, kind: output, shape index: {}]
  %s2 = sld [smem:[#allocation0]]
  $region45: #{tpu_custom_call.1} parent=0
    _
  %s4 = ssub.s32 1, %s2
  %s5 = scalar_select 0, %s4, %s2
  $region1: #{tpu_custom_call.1} parent=0
    #allocation2 [shape = 'u8[4096]{0}', space=vmem, size = 0x1000, scoped, tag = 'input window, operand 0']
    #allocation3 [shape = 's32[2]{0}', space=sflag, size = 0x8, scoped, tag = 'scoped memory for tpu_custom_call.1']
    #allocation4 [shape = 's32[2]{0}', space=sflag, size = 0x8, scoped, tag = 'scoped memory for tpu_custom_call.1']
    #allocation5 [shape = 'u8[1024]{0}', space=vmem, size = 0x400, scoped, tag = 'output window, operand 0']
    %6 = vsyncpa [#allocation3], 0
    %s7 = scalar_lea.sflag [#allocation3], 1
    %8 = vsyncpa %s7, 0
    %9 = vsyncpa [#allocation4], 0
    %s10 = scalar_lea.sflag [#allocation4], 1
    %11 = vsyncpa %s10, 0
    loop: start=0, step=1, limit=4
    $region2: #{tpu_custom_call.1} parent=1 // loop_pre_header
      _
    $region3: #{tpu_custom_call.1} parent=1 // loop_header
      %s13 = sphi 0, %s17
      %p14 = scmp.ge.s32.totalorder %s13, 4
      %s20 = sphi 0, %s39
      %s21 = sphi 0, %s35
      %s22 = sphi 0, %s31
      %s23 = sphi 0, %s20
      %s24 = sphi 0, %s21
      %s25 = sphi 0, %s22
      %s26 = sphi 0, %s23
      %s27 = sphi 0, %s24
      %s28 = sphi 0, %s25
      %s46 = sphi 0, %s48
      %s49 = sphi 0, %s46
      %s50 = sphi 0, %s49
      %s66 = sphi 0, %s50
      %s74 = sphi 0, %s76
      %s77 = sphi 0, %s74
      %s78 = sphi 0, %s77
      %s94 = sphi 0, %s78
    $region4: #{tpu_custom_call.1} parent=1 // loop_header_branch
      %16 = sbr.rel (%p14) target = $region8
    $region5: #{tpu_custom_call.1} parent=1 // loop_body
      %s18 = ssub.s32 %s13, 1
      %s19 = ssub.s32 %s13, 2
      %s29 = sadd.s32 1, %s22
      %p30 = scmp.ge.s32.totalorder %s29, 1
      %s31 = scalar_select %p30, 0, %s29
      %s32 = sadd.s32 1, %s21
      %s33 = scalar_select %p30, %s32, %s21
      %p34 = scmp.ge.s32.totalorder %s33, 1
      %s35 = scalar_select %p34, 0, %s33
      %s36 = sadd.s32 1, %s20
      %s37 = scalar_select %p34, %s36, %s20
      %p38 = scmp.ge.s32.totalorder %s37, 2
      %s39 = scalar_select %p38, 0, %s37
      %s40 = ssub.s32 %s20, %s39
      %s41 = ssub.s32 %s21, %s35
      %s42 = sor.u32 %s40, %s41
      %s43 = ssub.s32 %s22, %s31
      %s44 = sor.u32 %s42, %s43
      %p45 = scmp.eq.s32.totalorder %s44, 0
      %s47 = sadd.s32 %s46, 1
      %s48 = scalar_select %p45, %s46, %s47
      %p51 = pneg %p45
      %p52 = scmp.eq.s32.totalorder %s13, 1
      %p53 = por %p51, %p52
      %p54 = scmp.ne.s32.totalorder %s46, %s49
      %p55 = scmp.eq.s32.totalorder %s13, 0
      %p56 = por %p54, %p55
      %p57 = scmp.ne.s32.totalorder %s46, %s49
      %p58 = scmp.eq.s32.totalorder %s18, 1
      %p59 = por %p57, %p58
      %p60 = scmp.ne.s32.totalorder %s49, %s50
      %p61 = scmp.eq.s32.totalorder %s18, 0
      %p62 = por %p60, %p61
      %p63 = scmp.ne.s32.totalorder %s49, %s50
      %p64 = scmp.eq.s32.totalorder %s19, 1
      %p65 = por %p63, %p64
      %p67 = scmp.ne.s32.totalorder %s50, %s66
      %p68 = scmp.eq.s32.totalorder %s19, 0
      %p69 = por %p67, %p68
      %s70 = ssub.s32 %s20, %s39
      %s71 = ssub.s32 %s21, %s35
      %s72 = sor.u32 %s70, %s71
      %p73 = scmp.eq.s32.totalorder %s72, 0
      %s75 = sadd.s32 %s74, 1
      %s76 = scalar_select %p73, %s74, %s75
      %p79 = pneg %p73
      %p80 = scmp.eq.s32.totalorder %s13, 1
      %p81 = por %p79, %p80
      %p82 = scmp.ne.s32.totalorder %s74, %s77
      %p83 = scmp.eq.s32.totalorder %s13, 0
      %p84 = por %p82, %p83
      %p85 = scmp.ne.s32.totalorder %s74, %s77
      %p86 = scmp.eq.s32.totalorder %s18, 1
      %p87 = por %p85, %p86
      %p88 = scmp.ne.s32.totalorder %s77, %s78
      %p89 = scmp.eq.s32.totalorder %s18, 0
      %p90 = por %p88, %p89
      %p91 = scmp.ne.s32.totalorder %s77, %s78
      %p92 = scmp.eq.s32.totalorder %s19, 1
      %p93 = por %p91, %p92
      %p95 = scmp.ne.s32.totalorder %s78, %s94
      %p96 = scmp.eq.s32.totalorder %s19, 0
      %p97 = por %p95, %p96
      %p98 = scmp.le.s32.totalorder 1, %s13
      %p99 = scmp.lt.s32.totalorder %s13, 3
      %p100 = pnand %p98, %p99
      %p101 = pneg %p100
      // Predicated region
      $region9: #{tpu_custom_call.1} parent=5 // pred_check
        _
      $region10: #{tpu_custom_call.1} parent=5 // pred_check_branch
        %103 = sbr.rel (%p100) target = $region12
      $region11: #{tpu_custom_call.1} parent=5 // pred_region
        %s104 = ssub.s32 %s13, 1
      $region12: #{tpu_custom_call.1} parent=5 // pred_fallthru
        _
      %p105 = scmp.lt.s32.totalorder %s13, 2
      // Predicated region
      $region13: #{tpu_custom_call.1} parent=5 // pred_check
        %p106 = pneg %p105
      $region14: #{tpu_custom_call.1} parent=5 // pred_check_branch
        %108 = sbr.rel (%p106) target = $region16
      $region15: #{tpu_custom_call.1} parent=5 // pred_region
        // Predicated region
        $region17: #{tpu_custom_call.1} parent=15 // pred_check
          %p109 = pneg %p56
        $region18: #{tpu_custom_call.1} parent=15 // pred_check_branch
          %111 = sbr.rel (%p109) target = $region20
        $region19: #{tpu_custom_call.1} parent=15 // pred_region
          %s112 = sand.u32 %s46, 1
          %s113 = scalar_lea.sflag [#allocation3], %s112
          %s114 = sand.u32 %s46, 1
          %s115 = smul.addr %s114, 4
          %s116 = scalar_lea.vmem [#allocation2], %s115
          %s118 = ssub.s32 64, 64
          %119 = vsyncadd %s113, %s118
          %s120 = sadd.s32 %s22, %s21
          %s121 = sadd.s32 %s120, %s20
          %s122 = smul.addr %s121, 64
          %s123 = scalar_lea.hbm %s0, %s122
          %s125 = sshll.u32 %s116, 4
          %s126 = int_to_ptr.vmem [resolvable:$true] %s125
          %128 = dma.hbm_to_vmem [thread:$0]  %s123, 64, %s126, %s113
        $region20: #{tpu_custom_call.1} parent=15 // pred_fallthru
          _
      $region16: #{tpu_custom_call.1} parent=5 // pred_fallthru
        _
      %p129 = scmp.le.s32.totalorder 1, %s13
      %p130 = scmp.lt.s32.totalorder %s13, 3
      %p131 = pnand %p129, %p130
      %p132 = pneg %p131
      // Predicated region
      $region21: #{tpu_custom_call.1} parent=5 // pred_check
        _
      $region22: #{tpu_custom_call.1} parent=5 // pred_check_branch
        %134 = sbr.rel (%p131) target = $region24
      $region23: #{tpu_custom_call.1} parent=5 // pred_region
        %s135 = ssub.s32 %s13, 1
        %s136 = sand.u32 %s49, 1
        %s137 = scalar_lea.sflag [#allocation3], %s136
        %s138 = sand.u32 %s49, 1
        %s139 = smul.addr %s138, 4
        %s140 = scalar_lea.vmem [#allocation2], %s139
        // Predicated region
        $region25: #{tpu_custom_call.1} parent=23 // pred_check
          %p141 = pneg %p62
        $region26: #{tpu_custom_call.1} parent=23 // pred_check_branch
          %143 = sbr.rel (%p141) target = $region28
        $region27: #{tpu_custom_call.1} parent=23 // pred_region
          %144 = dma.done %s137, 64
        $region28: #{tpu_custom_call.1} parent=23 // pred_fallthru
          _
        %s145 = sand.u32 %s49, 1
        %s146 = scalar_lea.sflag [#allocation3], %s145
        %s147 = sand.u32 %s49, 1
        %s148 = smul.addr %s147, 4
        %s149 = scalar_lea.vmem [#allocation2], %s148
        %p150 = pneg %p62
        %p151 = pneg %p59
        %p152 = pneg %p90
        %p153 = pneg %p87
        %s154 = sand.u32 %s77, 1
        %s155 = scalar_lea.sflag [#allocation4], %s154
        %s156 = sand.u32 %s77, 1
        %s157 = scalar_lea.vmem [#allocation5], %s156
        %p158 = scmp.eq.s32.totalorder %s25, 0
        // Predicated region
        $region29: #{tpu_custom_call.1} parent=23 // pred_check
          %p159 = pneg %p158
        $region30: #{tpu_custom_call.1} parent=23 // pred_check_branch
          %161 = sbr.rel (%p159) target = $region32
        $region31: #{tpu_custom_call.1} parent=23 // pred_region
          %vm162 = vcmask 24576
          %163 = vst.msk [vmem:[%s157] sm:$0x1] %vm162, 0.0
        $region32: #{tpu_custom_call.1} parent=23 // pred_fallthru
          _
        %v164 = vld [vmem:[%s157] sm:$0x1]
        %v165 = vld [vmem:[%s140] sm:$0xf]
        %vm166 = vcmask 125952
        %v167 = vsel %vm166, %v165, 0.0
        %168 = vadd.xlane.f32.xlu0 %v167
        %v169 = vpop.xlane.xlu0 %168
        %v171 = vlaneseq
        %v172 = vshrl.u32 %v171, 7
        %v173 = vsub.s32 0, %v172
        %v174 = vrot.slane %v169, %v173
        %v175 = vlaneseq
        %v176 = vshrl.u32 %v175, 7
        %v177 = vsub.s32 1, %v176
        %v178 = vrot.slane %v169, %v177
        %v179 = vlaneseq
        %v180 = vshrl.u32 %v179, 7
        %v181 = vsub.s32 2, %v180
        %v182 = vrot.slane %v169, %v181
        %v183 = vlaneseq
        %v184 = vshrl.u32 %v183, 7
        %v185 = vsub.s32 3, %v184
        %v186 = vrot.slane %v169, %v185
        %v187 = vcombine.low %v174, %v178
        %v188 = vcombine.low %v182, %v186
        %v190 = vunpack.c.l.s4 1966171168
        %v191 = vunpack.c.0.s8 %v190
        %v192 = vlaneseq
        %v193 = vshrl.u32 %v192, 7
        %v194 = vsub.s32 %v191, %v193
        %v195 = vrot.slane %v187, %v194
        %v197 = vunpack.c.l.s4 1966171168
        %v198 = vunpack.c.0.s8 %v197
        %v199 = vlaneseq
        %v200 = vshrl.u32 %v199, 7
        %v201 = vsub.s32 %v198, %v200
        %v202 = vrot.slane %v188, %v201
        %v203 = vcombine.low %v195, %v202
        %v205 = vunpack.c.l.s4 1966171168
        %v206 = vunpack.c.0.s8 %v205
        %v207 = vlaneseq
        %v208 = vshrl.u32 %v207, 7
        %v209 = vsub.s32 %v206, %v208
        %v210 = vrot.slane %v203, %v209
        %211 = vset.pattern.permute.xlu0 0
        %212 = vperm.xlu0 %211, %v210
        %v213 = vpop.permute.xlu0 %212
        %v214 = vlaneseq
        %v215 = vand.u32 %v214, 127
        %v216 = vlaneseq
        %v217 = vshrl.u32 %v216, 7
        %v218 = vsub.s32 %v215, %v217
        %v219 = vrot.slane %v213, %v218
        %v221 = vunpack.c.l.s4 1966171168
        %v222 = vunpack.c.0.s8 %v221
        %v223 = vlaneseq
        %v224 = vshrl.u32 %v223, 7
        %v225 = vsub.s32 %v222, %v224
        %v226 = vrot.slane %v219, %v225
        %v228 = vunpack.c.l.s4 1966171168
        %v229 = vunpack.c.0.s8 %v228
        %v230 = vlaneseq
        %v231 = vshrl.u32 %v230, 7
        %v232 = vsub.s32 %v229, %v231
        %v233 = vrot.slane %v226, %v232
        %v235 = vadd.f32 %v164, %v233
        %vm236 = vcmask 24576
        %237 = vst.msk [vmem:[%s157] sm:$0x1] %vm236, %v235
        %s238 = sand.u32 %s77, 1
        %s239 = scalar_lea.sflag [#allocation4], %s238
        %s240 = sand.u32 %s77, 1
        %s241 = scalar_lea.vmem [#allocation5], %s240
        // Predicated region
        $region33: #{tpu_custom_call.1} parent=23 // pred_check
          %p242 = pneg %p87
        $region34: #{tpu_custom_call.1} parent=23 // pred_check_branch
          %244 = sbr.rel (%p242) target = $region36
        $region35: #{tpu_custom_call.1} parent=23 // pred_region
          %s246 = ssub.s32 16, 16
          %247 = vsyncadd %s239, %s246
          %s248 = sadd.s32 %s24, %s23
          %s249 = smul.addr %s248, 16
          %s250 = scalar_lea.hbm %s1, %s249
          %s252 = sshll.u32 %s241, 4
          %s253 = int_to_ptr.vmem [resolvable:$true] %s252
          %255 = dma.vmem_to_hbm [thread:$0]  %s253, 16, %s250, %s239
        $region36: #{tpu_custom_call.1} parent=23 // pred_fallthru
          _
      $region24: #{tpu_custom_call.1} parent=5 // pred_fallthru
        _
      %p256 = scmp.le.s32.totalorder 2, %s13
      // Predicated region
      $region37: #{tpu_custom_call.1} parent=5 // pred_check
        %p257 = pneg %p256
      $region38: #{tpu_custom_call.1} parent=5 // pred_check_branch
        %259 = sbr.rel (%p257) target = $region40
      $region39: #{tpu_custom_call.1} parent=5 // pred_region
        %s260 = ssub.s32 %s13, 2
        // Predicated region
        $region41: #{tpu_custom_call.1} parent=39 // pred_check
          %p261 = pneg %p93
        $region42: #{tpu_custom_call.1} parent=39 // pred_check_branch
          %263 = sbr.rel (%p261) target = $region44
        $region43: #{tpu_custom_call.1} parent=39 // pred_region
          %s264 = sand.u32 %s78, 1
          %s265 = scalar_lea.sflag [#allocation4], %s264
          %s266 = sand.u32 %s78, 1
          %s267 = scalar_lea.vmem [#allocation5], %s266
          %268 = dma.done %s265, 16
        $region44: #{tpu_custom_call.1} parent=39 // pred_fallthru
          _
      $region40: #{tpu_custom_call.1} parent=5 // pred_fallthru
        _
    $region6: #{tpu_custom_call.1} parent=1 // loop_footer
      %s17 = sadd.s32 1, %s13
    $region7: #{tpu_custom_call.1} parent=1 // loop_footer_branch
      %12 = sbr.rel target = $region3
    $region8: #{tpu_custom_call.1} parent=1 // loop_exit
      _
    %269 = vsyncpa [#allocation3], 1
    %s270 = scalar_lea.sflag [#allocation3], 1
    %271 = vsyncpa %s270, 1
    %272 = vsyncpa [#allocation4], 1
    %s273 = scalar_lea.sflag [#allocation4], 1
    %274 = vsyncpa %s273, 1

</llo_original>
